<compile_context>
chip_gen: v7x
topology: tpu7x:2x2x1
jax: 0.10.0
libtpu: 0.0.40
codegen_flags: <defaults>
</compile_context>

<pallas_src>
import functools

import jax
import jax.numpy as jnp
from jax import lax
from jax.experimental import pallas as pl
from jax.experimental.pallas import tpu as pltpu


def _top1_svm_kernel(x_ref, y_ref, o_ref, acc_ref, *, alpha, n_rows,
                     tile_rows, tiles_per_partial):
    p = pl.program_id(0)          # partial index ("parallel", megacore split)
    i = pl.program_id(1)          # batch-tile index ("arbitrary", reduction)

    @pl.when(i == 0)
    def _init():
        acc_ref[...] = jnp.zeros_like(acc_ref)

    x = x_ref[...].astype(jnp.float32)        # (TN, C) scores (bf16/f32 in HBM)
    y = y_ref[...]                            # (TN, 1) int32 labels
    tn, c = x.shape

    # ground-truth mask, integer compare (exact, cheaper than f32 compare)
    col = lax.broadcasted_iota(jnp.int32, (tn, c), 1)
    gt = col == y                             # (TN, C) bool

    # max oracle: max_c (x + alpha * [c != y])
    aug = x + jnp.where(gt, jnp.float32(0.0), jnp.float32(alpha))
    max_aug = jnp.max(aug, axis=1, keepdims=True)                     # (TN, 1)
    # ground-truth score
    x_gt = jnp.sum(jnp.where(gt, x, jnp.float32(0.0)), axis=1, keepdims=True)
    per_row = max_aug - x_gt                  # (TN, 1), >= 0 by construction

    # mask rows past the true batch size (ragged last tile / padded rows)
    row = lax.broadcasted_iota(jnp.int32, (tn, 1), 0)
    gidx = (p * tiles_per_partial + i) * tile_rows + row
    per_row = jnp.where(gidx < n_rows, per_row, jnp.float32(0.0))

    acc_ref[...] += jnp.sum(per_row, keepdims=True)                   # (1, 1)

    @pl.when(i == pl.num_programs(1) - 1)
    def _finalize():
        # each partial is already scaled by 1/N; wrapper just sums partials
        o_ref[0] = acc_ref[...] * jnp.float32(1.0 / n_rows)


def _choose_tile_rows(n_rows, n_classes, itemsize,
                      vmem_budget_bytes=12 * 1024 * 1024):
    """Rows per tile: double-buffered x tile + lane-padded (TN,1) label tile."""
    per_row_bytes = 2 * (n_classes * itemsize + 128 * 4)   # 2 = double buffer
    tn = vmem_budget_bytes // per_row_bytes
    tn = max(8, min(int(tn), 8192))
    tn -= tn % 8                                            # (8,128) sublane rule
    n_pad = ((n_rows + 7) // 8) * 8
    return max(8, min(tn, n_pad))


def max_top1_svm_loss(x, y, *, alpha=1.0):
    """Forward of MaxTop1SVM: F.Top1_Hard_SVM(labels, alpha)(x, y).mean()."""
    n, c = x.shape
    y2 = y.astype(jnp.int32).reshape(n, 1)

    itemsize = jnp.dtype(x.dtype).itemsize
    tn = _choose_tile_rows(n, c, itemsize)
    n_tiles = -(-n // tn)
    # two partial sums when the tile count splits evenly -> both TCs on v7x
    num_partials = 2 if (n_tiles >= 2 and n_tiles % 2 == 0) else 1
    tiles_per_partial = n_tiles // num_partials

    kernel = functools.partial(
        _top1_svm_kernel,
        alpha=float(alpha),
        n_rows=n,
        tile_rows=tn,
        tiles_per_partial=tiles_per_partial,
    )

    out = pl.pallas_call(
        kernel,
        out_shape=jax.ShapeDtypeStruct((num_partials, 1, 1), jnp.float32),
        grid_spec=pltpu.PrefetchScalarGridSpec(
            num_scalar_prefetch=0,
            grid=(num_partials, tiles_per_partial),
            in_specs=[
                pl.BlockSpec((tn, c),
                             lambda p, i: (p * tiles_per_partial + i, 0)),
                pl.BlockSpec((tn, 1),
                             lambda p, i: (p * tiles_per_partial + i, 0)),
            ],
            out_specs=pl.BlockSpec((1, 1, 1), lambda p, i: (p, 0, 0)),
            scratch_shapes=[pltpu.VMEM((1, 1), jnp.float32)],
        ),
        compiler_params=pltpu.CompilerParams(
            dimension_semantics=("parallel", "arbitrary"),
            vmem_limit_bytes=32 * 1024 * 1024,
        ),
        cost_estimate=pl.CostEstimate(
            flops=5 * n * c,
            transcendentals=0,
            bytes_accessed=n * c * itemsize + n * 4 + num_partials * 4,
        ),
    )(x, y2)
    return jnp.sum(out)


def _reference_loss(x, y, alpha):
    # pure-JAX reference mirroring F.Top1_Hard_SVM + .mean()
    _, c = x.shape
    mask = jnp.arange(c)[None, :] == y[:, None]
    aug = x.astype(jnp.float32) + jnp.where(mask, 0.0, alpha)
    x_gt = jnp.sum(jnp.where(mask, x.astype(jnp.float32), 0.0), axis=1)
    return jnp.mean(jnp.max(aug, axis=1) - x_gt)


if __name__ == "__main__":
    # MaxTop1SVM(n_classes=16, alpha=None -> 1.0); batch of 8 samples.
    n_classes, batch, alpha = 16, 8, 1.0
    key = jax.random.PRNGKey(0)
    kx, ky = jax.random.split(key)
    x = jax.random.normal(kx, (batch, n_classes), dtype=jnp.float32)
    y = jax.random.randint(ky, (batch,), 0, n_classes, dtype=jnp.int32)

    out = jax.block_until_ready(max_top1_svm_loss(x, y, alpha=alpha))
    ref = jax.block_until_ready(_reference_loss(x, y, alpha))
    assert jnp.allclose(out, ref, atol=1e-5, rtol=1e-5), (out, ref)

    # ragged batch (exercises boundary-block masking) with a different alpha
    x2 = jax.random.normal(kx, (13, n_classes), dtype=jnp.float32)
    y2 = jax.random.randint(ky, (13,), 0, n_classes, dtype=jnp.int32)
    out2 = jax.block_until_ready(max_top1_svm_loss(x2, y2, alpha=2.0))
    ref2 = jax.block_until_ready(_reference_loss(x2, y2, 2.0))
    assert jnp.allclose(out2, ref2, atol=1e-5, rtol=1e-5), (out2, ref2)

    # TODO(synk): tau setter / get_losses() re-dispatch and cuda()/cpu() device
    # plumbing have no compute; omitted.
    print("KERNEL_OK")
</pallas_src>

<mosaic_0001>
module attributes {stable_mosaic.version = 11 : i64} {
  func.func @_top1_svm_kernel(%arg0: i32, %arg1: i32, %arg2: memref<8x16xf32, #tpu.memory_space<vmem>>, %arg3: memref<8x1xi32, #tpu.memory_space<vmem>>, %arg4: memref<1x1x1xf32, #tpu.memory_space<vmem>>, %arg5: memref<1x1xf32, #tpu.memory_space<vmem>>) attributes {dimension_semantics = [#tpu.dimension_semantics<parallel>, #tpu.dimension_semantics<arbitrary>], iteration_bounds = array<i64: 1, 1>, scalar_prefetch = 0 : i64, scratch_operands = 1 : i64, tpu.core_type = #tpu.core_type<tc>, window_params = [{transform_indices = @transform_0, window_bounds = array<i64: 8, 16>}, {transform_indices = @transform_1, window_bounds = array<i64: 8, 1>}, {transform_indices = @transform_2, window_bounds = array<i64: 1, 1, 1>}]} {
    %c0_i32 = arith.constant 0 : i32
    %0 = arith.cmpi eq, %arg1, %c0_i32 : i32
    %1 = arith.extui %0 : i1 to i32
    %c0_i32_0 = arith.constant 0 : i32
    %2 = arith.cmpi ne, %1, %c0_i32_0 : i32
    scf.if %2 {
      %cst_17 = arith.constant 0.000000e+00 : f32
      %40 = vector.broadcast %cst_17 : f32 to vector<1x1xf32>
      %c0_18 = arith.constant 0 : index
      %c0_19 = arith.constant 0 : index
      %41 = vector.load %arg5[%c0_18, %c0_19] : memref<1x1xf32, #tpu.memory_space<vmem>>, vector<1x1xf32>
      tpu.vector_store %arg5[%c0_18, %c0_19], %40 {strides = array<i32>} : memref<1x1xf32, #tpu.memory_space<vmem>>, vector<1x1xf32>,
    } else {
    }
    %c0 = arith.constant 0 : index
    %c0_1 = arith.constant 0 : index
    %3 = vector.load %arg2[%c0, %c0_1] : memref<8x16xf32, #tpu.memory_space<vmem>>, vector<8x16xf32>
    %c0_2 = arith.constant 0 : index
    %c0_3 = arith.constant 0 : index
    %4 = vector.load %arg3[%c0_2, %c0_3] : memref<8x1xi32, #tpu.memory_space<vmem>>, vector<8x1xi32>
    %5 = tpu.iota {dimensions = array<i32: 1>} : vector<8x16xi32>
    %6 = vector.broadcast %4 : vector<8x1xi32> to vector<8x16xi32>
    %7 = arith.cmpi eq, %5, %6 : vector<8x16xi32>
    %cst = arith.constant 0.000000e+00 : f32
    %cst_4 = arith.constant 1.000000e+00 : f32
    %8 = vector.broadcast %cst : f32 to vector<8x16xf32>
    %9 = vector.broadcast %cst_4 : f32 to vector<8x16xf32>
    %10 = arith.select %7, %8, %9 : vector<8x16xi1>, vector<8x16xf32>
    %11 = arith.addf %3, %10 : vector<8x16xf32>
    %cst_5 = arith.constant dense<0xFF800000> : vector<8xf32>
    %12 = vector.multi_reduction <maximumf>, %11, %cst_5 [1] : vector<8x16xf32> to vector<8xf32>
    %13 = vector.shape_cast %12 : vector<8xf32> to vector<8x1xf32>
    %cst_6 = arith.constant 0.000000e+00 : f32
    %14 = vector.broadcast %cst_6 : f32 to vector<8x16xf32>
    %15 = arith.select %7, %3, %14 : vector<8x16xi1>, vector<8x16xf32>
    %cst_7 = arith.constant dense<0.000000e+00> : vector<8xf32>
    %16 = vector.multi_reduction <add>, %15, %cst_7 [1] : vector<8x16xf32> to vector<8xf32>
    %17 = vector.shape_cast %16 : vector<8xf32> to vector<8x1xf32>
    %18 = arith.subf %13, %17 : vector<8x1xf32>
    %19 = tpu.iota {dimensions = array<i32: 0>} : vector<8x1xi32>
    %c1_i32 = arith.constant 1 : i32
    %20 = arith.muli %arg0, %c1_i32 : i32
    %21 = arith.addi %20, %arg1 : i32
    %c8_i32 = arith.constant 8 : i32
    %22 = arith.muli %21, %c8_i32 : i32
    %23 = vector.broadcast %22 : i32 to vector<8x1xi32>
    %24 = arith.addi %23, %19 : vector<8x1xi32>
    %c8_i32_8 = arith.constant 8 : i32
    %25 = vector.broadcast %c8_i32_8 : i32 to vector<8x1xi32>
    %26 = arith.cmpi slt, %24, %25 : vector<8x1xi32>
    %cst_9 = arith.constant 0.000000e+00 : f32
    %27 = vector.broadcast %cst_9 : f32 to vector<8x1xf32>
    %28 = arith.select %26, %18, %27 : vector<8x1xi1>, vector<8x1xf32>
    %c0_10 = arith.constant 0 : index
    %c0_11 = arith.constant 0 : index
    %29 = vector.load %arg5[%c0_10, %c0_11] : memref<1x1xf32, #tpu.memory_space<vmem>>, vector<1x1xf32>
    %30 = vector.shape_cast %28 : vector<8x1xf32> to vector<1x8x1xf32>
    %cst_12 = arith.constant dense<0.000000e+00> : vector<1xf32>
    %31 = vector.multi_reduction <add>, %30, %cst_12 [1, 2] : vector<1x8x1xf32> to vector<1xf32>
    %32 = vector.shape_cast %31 : vector<1xf32> to vector<1x1x1xf32>
    %33 = vector.extract %32[0, 0, 0] : f32 from vector<1x1x1xf32>
    %34 = vector.broadcast %33 : f32 to vector<1x1xf32>
    %35 = arith.addf %29, %34 : vector<1x1xf32>
    %c0_13 = arith.constant 0 : index
    %c0_14 = arith.constant 0 : index
    %36 = vector.load %arg5[%c0_13, %c0_14] : memref<1x1xf32, #tpu.memory_space<vmem>>, vector<1x1xf32>
    tpu.vector_store %arg5[%c0_13, %c0_14], %35 {strides = array<i32>} : memref<1x1xf32, #tpu.memory_space<vmem>>, vector<1x1xf32>,
    %c0_i32_15 = arith.constant 0 : i32
    %37 = arith.cmpi eq, %arg1, %c0_i32_15 : i32
    %38 = arith.extui %37 : i1 to i32
    %c0_i32_16 = arith.constant 0 : i32
    %39 = arith.cmpi ne, %38, %c0_i32_16 : i32
    scf.if %39 {
      %c0_17 = arith.constant 0 : index
      %c0_18 = arith.constant 0 : index
      %40 = vector.load %arg5[%c0_17, %c0_18] : memref<1x1xf32, #tpu.memory_space<vmem>>, vector<1x1xf32>
      %cst_19 = arith.constant 1.250000e-01 : f32
      %41 = vector.broadcast %cst_19 : f32 to vector<1x1xf32>
      %42 = arith.mulf %40, %41 : vector<1x1xf32>
      %c0_20 = arith.constant 0 : index
      %c0_21 = arith.constant 0 : index
      %c0_22 = arith.constant 0 : index
      %43 = vector.load %arg4[%c0_20, %c0_21, %c0_22] : memref<1x1x1xf32, #tpu.memory_space<vmem>>, vector<1x1x1xf32>
      %44 = vector.shape_cast %43 : vector<1x1x1xf32> to vector<1x1xf32>
      %45 = vector.shape_cast %42 : vector<1x1xf32> to vector<1x1x1xf32>
      tpu.vector_store %arg4[%c0_20, %c0_21, %c0_22], %45 {strides = array<i32>} : memref<1x1x1xf32, #tpu.memory_space<vmem>>, vector<1x1x1xf32>,
    } else {
    }
    return
  }
  func.func @transform_0(%arg0: i32, %arg1: i32) -> (i32, i32) {
    %c1_i32 = arith.constant 1 : i32
    %0 = arith.muli %arg0, %c1_i32 : i32
    %1 = arith.addi %0, %arg1 : i32
    %c0_i32 = arith.constant 0 : i32
    %c0_i32_0 = arith.constant 0 : i32
    return %1, %c0_i32 : i32, i32
  }
  func.func @transform_1(%arg0: i32, %arg1: i32) -> (i32, i32) {
    %c1_i32 = arith.constant 1 : i32
    %0 = arith.muli %arg0, %c1_i32 : i32
    %1 = arith.addi %0, %arg1 : i32
    %c0_i32 = arith.constant 0 : i32
    %c0_i32_0 = arith.constant 0 : i32
    return %1, %c0_i32 : i32, i32
  }
  func.func @transform_2(%arg0: i32, %arg1: i32) -> (i32, i32, i32) {
    %c0_i32 = arith.constant 0 : i32
    %c0_i32_0 = arith.constant 0 : i32
    %c0_i32_1 = arith.constant 0 : i32
    return %arg0, %c0_i32, %c0_i32_0 : i32, i32, i32
  }
}

</mosaic_0001>

<llo_original>
// kernel: tpu_custom_call.1
$region0: #{tpu_custom_call.1}
  #allocation0 [shape = 'u32[]', space=smem, size = 0x4, offset = 0x4, fixed_abs, tag = 'smem constant byte address 0x4 - core index']
  #allocation1 [shape = 'u32[144,128]{1,0:T(1,128)}', space=vmem, size = 0x12000, scoped, tag = 'internal scratch']
  #allocation2 [shape = 'f32[1,1]{1,0:T(1,128)}', space=vmem, size = 0x200, scoped, tag = 'scratch operand']
  %s0 = inlined_call_operand.vmem [shape: f32[8,16], index: 0, kind: input, shape index: {}]
  %s1 = inlined_call_operand.vmem [shape: s32[8,1], index: 1, kind: input, shape index: {}]
  %s2 = inlined_call_operand.hbm [shape: f32[1,1,1], index: 2, kind: output, shape index: {}]
  %s3 = sld [smem:[#allocation0]]
  $region26: #{tpu_custom_call.1} parent=0
    _
  %s5 = ssub.s32 1, %s3
  %s6 = scalar_select 0, %s5, %s3
  $region1: #{tpu_custom_call.1} parent=0
    #allocation3 [shape = 'u8[512]{0}', space=vmem, size = 0x400, scoped, tag = 'output window, operand 0, single buffered']
    #allocation4 [shape = 's32[1]{0}', space=sflag, size = 0x4, scoped, tag = 'scoped memory for tpu_custom_call.1']
    %7 = vsyncpa [#allocation4], 0
    // Predicated region
    $region2: #{tpu_custom_call.1} parent=1 // pred_check
      _
    $region3: #{tpu_custom_call.1} parent=1 // pred_check_branch
      %9 = sbr.rel (0) target = $region5
    $region4: #{tpu_custom_call.1} parent=1 // pred_region
      %s10 = sadd.s32 0, 0
      %p11 = scmp.lt.s32.totalorder %s10, 0
      %s12 = scalar_select %p11, %s10, 0
      %s13 = smul.addr %s12, 8
      %s14 = scalar_lea.vmem %s0, %s13
      %s15 = sadd.s32 0, 0
    $region5: #{tpu_custom_call.1} parent=1 // pred_fallthru
      _
    // Predicated region
    $region6: #{tpu_custom_call.1} parent=1 // pred_check
      _
    $region7: #{tpu_custom_call.1} parent=1 // pred_check_branch
      %17 = sbr.rel (0) target = $region9
    $region8: #{tpu_custom_call.1} parent=1 // pred_region
      %s18 = sadd.s32 0, 0
      %p19 = scmp.lt.s32.totalorder %s18, 0
      %s20 = scalar_select %p19, %s18, 0
      %s21 = smul.addr %s20, 8
      %s22 = scalar_lea.vmem %s1, %s21
      %s23 = sadd.s32 0, 0
    $region9: #{tpu_custom_call.1} parent=1 // pred_fallthru
      _
    %s24 = sadd.s32 0, 0
    %p25 = scmp.lt.s32.totalorder %s24, 0
    %s26 = scalar_select %p25, %s24, 0
    %s27 = smul.addr %s26, 8
    %s28 = scalar_lea.vmem %s0, %s27
    %s29 = sadd.s32 0, 0
    %p30 = scmp.lt.s32.totalorder %s29, 0
    %s31 = scalar_select %p30, %s29, 0
    %s32 = smul.addr %s31, 8
    %s33 = scalar_lea.vmem %s1, %s32
    %s34 = sadd.s32 0, 0
    %p35 = scmp.lt.s32.totalorder %s34, 0
    %s36 = scalar_select %p35, %s34, 0
    %s37 = smul.addr %s36, 8
    %s38 = scalar_lea.vmem %s0, %s37
    %s39 = sadd.s32 0, 0
    %s40 = sadd.s32 0, 0
    %p41 = scmp.lt.s32.totalorder %s40, 0
    %s42 = scalar_select %p41, %s40, 0
    %s43 = smul.addr %s42, 8
    %s44 = scalar_lea.vmem %s1, %s43
    %s45 = sadd.s32 0, 0
    %p46 = scmp.eq.s32.totalorder 0, 0
    // Predicated region
    $region10: #{tpu_custom_call.1} parent=1 // pred_check
      %p47 = pneg %p46
    $region11: #{tpu_custom_call.1} parent=1 // pred_check_branch
      %49 = sbr.rel (%p47) target = $region13
    $region12: #{tpu_custom_call.1} parent=1 // pred_region
      %vm50 = vcmask 0
      %51 = vst.msk [vmem:[#allocation2] sm:$0x1] %vm50, 0.0
    $region13: #{tpu_custom_call.1} parent=1 // pred_fallthru
      _
    %v52 = vld [vmem:[%s38] sm:$0xff]
    %v53 = vld [vmem:[%s44] sm:$0xff]
    %v54 = vlaneseq
    %v55 = vand.u32 %v54, 127
    %56 = vset.pattern.permute.xlu0 0
    %57 = vperm.xlu0 %56, %v53
    %v58 = vpop.permute.xlu0 %57
    %vm59 = vcmp.eq.s32.totalorder %v55, %v58
    %v60 = vsel %vm59, 0.0, 1.0
    %v61 = vadd.f32 %v52, %v60
    %vm62 = vcmask 130048
    %v63 = vsel %vm62, %v61, -inf
    %64 = vmax.xlane.f32.xlu0 %v63
    %v65 = vpop.xlane.xlu0 %64
    %v66 = vsel %vm59, %v52, 0.0
    %v67 = vsel %vm62, %v66, 0.0
    %68 = vadd.xlane.f32.xlu0 %v67
    %v69 = vpop.xlane.xlu0 %68
    %v70 = vsub.f32 %v65, %v69
    %v71 = vlaneseq
    %v72 = vshrl.u32 %v71, 7
    %s73 = sadd.s32 0, 0
    %s74 = smul.u32 %s73, 8
    %v75 = vstv %s74
    %v76 = vadd.s32 %v75, %v72
    %vm77 = vcmp.lt.s32.totalorder %v76, 8
    %v78 = vsel %vm77, %v70, 0.0
    %v79 = vld [vmem:[#allocation2] sm:$0x1]
    %vm80 = vcmask 7168
    %v81 = vsel %vm80, %v78, 0.0
    %82 = vadd.xlane.f32.xlu0 %v81
    %v83 = vpop.xlane.xlu0 %82
    %v84 = vrot.slane %v83, 4
    %v85 = vadd.f32 %v83, %v84
    %v86 = vrot.slane %v85, 2
    %v87 = vadd.f32 %v85, %v86
    %v88 = vrot.slane %v87, 1
    %v89 = vadd.f32 %v87, %v88
    %s90 = vtos %v89
    %v91 = vstv %s90
    %v92 = vadd.f32 %v79, %v91
    %vm93 = vcmask 0
    %94 = vst.msk [vmem:[#allocation2] sm:$0x1] %vm93, %v92
    // Predicated region
    $region14: #{tpu_custom_call.1} parent=1 // pred_check
      %p95 = pneg %p46
    $region15: #{tpu_custom_call.1} parent=1 // pred_check_branch
      %97 = sbr.rel (%p95) target = $region17
    $region16: #{tpu_custom_call.1} parent=1 // pred_region
      %v98 = vld [vmem:[#allocation2] sm:$0x1]
      %v99 = vmul.f32 %v98, 0.125
      %100 = vst.msk [vmem:[#allocation3] sm:$0x1] %vm93, %v99
    $region17: #{tpu_custom_call.1} parent=1 // pred_fallthru
      _
    // Predicated region
    $region18: #{tpu_custom_call.1} parent=1 // pred_check
      _
    $region19: #{tpu_custom_call.1} parent=1 // pred_check_branch
      %102 = sbr.rel (0) target = $region21
    $region20: #{tpu_custom_call.1} parent=1 // pred_region
      %s104 = ssub.s32 16, 16
      %105 = vsyncadd [#allocation4], %s104
      %s107 = sshll.u32 [#allocation3], 4
      %s108 = int_to_ptr.vmem [resolvable:$true] %s107
      %110 = dma.vmem_to_hbm [thread:$0]  %s108, 16, %s2, [#allocation4]
    $region21: #{tpu_custom_call.1} parent=1 // pred_fallthru
      _
    // Predicated region
    $region22: #{tpu_custom_call.1} parent=1 // pred_check
      _
    $region23: #{tpu_custom_call.1} parent=1 // pred_check_branch
      %112 = sbr.rel (0) target = $region25
    $region24: #{tpu_custom_call.1} parent=1 // pred_region
      %113 = dma.done [#allocation4], 16
    $region25: #{tpu_custom_call.1} parent=1 // pred_fallthru
      _
    %114 = vsyncpa [#allocation4], 1

</llo_original>
